<compile_context>
chip_gen: v7x
topology: tpu7x:2x2x1
jax: 0.10.0
libtpu: 0.0.40
codegen_flags: <defaults>
</compile_context>

<pallas_src>
import jax
import jax.numpy as jnp
import numpy as np
from jax.experimental import pallas as pl
from jax.experimental.pallas import tpu as pltpu


def titanic_kernel(x_ref, w1_ref, b1_ref, w2_ref, b2_ref, w3_ref, b3_ref, o_ref):
    # fc1 + ReLU: (TB, 6) @ (6, 16) on the MXU (K=6; Mosaic masks the padded lanes).
    h1 = jnp.dot(x_ref[...], w1_ref[...], preferred_element_type=jnp.float32)
    h1 = jnp.maximum(h1 + b1_ref[...], 0.0)

    # fc2 + ReLU: (TB, 16) @ (16, 8) on the MXU.
    h2 = jnp.dot(h1, w2_ref[...], preferred_element_type=jnp.float32)
    h2 = jnp.maximum(h2 + b2_ref[...], 0.0)

    # fc3: (TB, 8) @ (8, 2) on the MXU -- compact 2-column output stored directly.
    out = jnp.dot(h2, w3_ref[...], preferred_element_type=jnp.float32) + b3_ref[...]
    o_ref[...] = out.astype(o_ref.dtype)


def titanic_net(x, w1, b1, w2, b2, w3, b3, *, block_b=32768):
    B, F = x.shape            # F == 6
    N_out = w3.shape[1]       # 2

    # Accept PyTorch-style (fan_out,) biases (or (1, fan_out)); kernel wants (1, N).
    b1 = jnp.asarray(b1).reshape(1, -1)
    b2 = jnp.asarray(b2).reshape(1, -1)
    b3 = jnp.asarray(b3).reshape(1, -1)

    # --- Batch tiling -------------------------------------------------------
    # Mem-bound kernel: big tiles amortize per-step overhead, but keep >= 2 grid
    # steps when B allows so both v7x TensorCores get work.
    TB = min(block_b, B)
    if B >= 16:
        TB = min(TB, (B + 1) // 2)
    TB = max(8, int(pl.cdiv(TB, 8) * 8))          # sublane-aligned tile
    B_pad = int(pl.cdiv(B, TB) * TB)

    x_p = x
    if B_pad != B:
        # Single padded last tile; padded rows are inert and sliced off below.
        x_p = jnp.pad(x, ((0, B_pad - B), (0, 0)))

    grid = (B_pad // TB,)

    # Weights/biases stay resident in VMEM across the whole grid (no re-DMA).
    pinned = lambda a: pl.BlockSpec(a.shape, lambda i: (0, 0))

    weight_bytes = 4 * (w1.size + b1.size + w2.size + b2.size + w3.size + b3.size)
    cost = pl.CostEstimate(
        flops=2 * B_pad * (F * 16 + 16 * 8 + 8 * N_out),
        transcendentals=0,
        bytes_accessed=B_pad * 4 * (F + N_out) + weight_bytes,
    )

    out = pl.pallas_call(
        titanic_kernel,
        out_shape=jax.ShapeDtypeStruct((B_pad, N_out), jnp.float32),
        grid=grid,
        in_specs=[
            pl.BlockSpec((TB, F), lambda i: (i, 0)),   # x: tiled over batch, unpadded
            pinned(w1), pinned(b1),
            pinned(w2), pinned(b2),
            pinned(w3), pinned(b3),
        ],
        out_specs=pl.BlockSpec((TB, N_out), lambda i: (i, 0)),  # compact (TB, 2) blocks
        compiler_params=pltpu.CompilerParams(
            dimension_semantics=("parallel",)),
        cost_estimate=cost,
    )(x_p, w1, b1, w2, b2, w3, b3)

    return out if B_pad == B else out[:B]


def init_linear(key, fan_in, fan_out):
    # Deterministic init mimicking nn.Linear's U(-1/sqrt(fan_in), 1/sqrt(fan_in)).
    kw, kb = jax.random.split(key)
    bound = 1.0 / np.sqrt(fan_in)
    w = jax.random.uniform(kw, (fan_in, fan_out), jnp.float32, -bound, bound)
    b = jax.random.uniform(kb, (fan_out,), jnp.float32, -bound, bound)  # PyTorch layout
    return w, b


def reference(x, w1, b1, w2, b2, w3, b3):
    h1 = jnp.maximum(x @ w1 + b1, 0.0)
    h2 = jnp.maximum(h1 @ w2 + b2, 0.0)
    return h2 @ w3 + b3


if __name__ == "__main__":
    key = jax.random.PRNGKey(0)
    k_x, k_x2, k1, k2, k3 = jax.random.split(key, 5)

    w1, b1 = init_linear(k1, 6, 16)
    w2, b2 = init_linear(k2, 16, 8)
    w3, b3 = init_linear(k3, 8, 2)

    # Small, tile-aligned batch (single grid step).
    batch = 8
    x = jax.random.normal(k_x, (batch, 6), jnp.float32)
    out = jax.block_until_ready(titanic_net(x, w1, b1, w2, b2, w3, b3))
    ref = reference(x, w1, b1, w2, b2, w3, b3)
    np.testing.assert_allclose(np.asarray(out), np.asarray(ref), rtol=1e-5, atol=1e-5)

    # Non-aligned batch with a small forced tile: exercises multi-step grid +
    # padded last tile + slice-off path.
    batch2 = 1003
    x2 = jax.random.normal(k_x2, (batch2, 6), jnp.float32)
    out2 = jax.block_until_ready(
        titanic_net(x2, w1, b1, w2, b2, w3, b3, block_b=256))
    ref2 = reference(x2, w1, b1, w2, b2, w3, b3)
    np.testing.assert_allclose(np.asarray(out2), np.asarray(ref2), rtol=1e-5, atol=1e-5)

    print("KERNEL_OK")
</pallas_src>

<mosaic_0001>
module attributes {stable_mosaic.version = 11 : i64} {
  func.func @titanic_kernel(%arg0: i32, %arg1: memref<8x6xf32, #tpu.memory_space<vmem>>, %arg2: memref<6x16xf32, #tpu.memory_space<vmem>>, %arg3: memref<1x16xf32, #tpu.memory_space<vmem>>, %arg4: memref<16x8xf32, #tpu.memory_space<vmem>>, %arg5: memref<1x8xf32, #tpu.memory_space<vmem>>, %arg6: memref<8x2xf32, #tpu.memory_space<vmem>>, %arg7: memref<1x2xf32, #tpu.memory_space<vmem>>, %arg8: memref<8x2xf32, #tpu.memory_space<vmem>>) attributes {dimension_semantics = [#tpu.dimension_semantics<parallel>], iteration_bounds = array<i64: 1>, scalar_prefetch = 0 : i64, scratch_operands = 0 : i64, tpu.core_type = #tpu.core_type<tc>, window_params = [{transform_indices = @transform_0, window_bounds = array<i64: 8, 6>}, {pipeline_mode = #tpu.pipeline_mode<synchronous>, transform_indices = @transform_1, window_bounds = array<i64: 6, 16>}, {pipeline_mode = #tpu.pipeline_mode<synchronous>, transform_indices = @transform_2, window_bounds = array<i64: 1, 16>}, {pipeline_mode = #tpu.pipeline_mode<synchronous>, transform_indices = @transform_3, window_bounds = array<i64: 16, 8>}, {pipeline_mode = #tpu.pipeline_mode<synchronous>, transform_indices = @transform_4, window_bounds = array<i64: 1, 8>}, {pipeline_mode = #tpu.pipeline_mode<synchronous>, transform_indices = @transform_5, window_bounds = array<i64: 8, 2>}, {pipeline_mode = #tpu.pipeline_mode<synchronous>, transform_indices = @transform_6, window_bounds = array<i64: 1, 2>}, {transform_indices = @transform_7, window_bounds = array<i64: 8, 2>}]} {
    %c0 = arith.constant 0 : index
    %c0_0 = arith.constant 0 : index
    %0 = vector.load %arg1[%c0, %c0_0] : memref<8x6xf32, #tpu.memory_space<vmem>>, vector<8x6xf32>
    %c0_1 = arith.constant 0 : index
    %c0_2 = arith.constant 0 : index
    %1 = vector.load %arg2[%c0_1, %c0_2] : memref<6x16xf32, #tpu.memory_space<vmem>>, vector<6x16xf32>
    %cst = arith.constant dense<0.000000e+00> : vector<8x16xf32>
    %2 = tpu.matmul %0, %1, %cst {dimension_numbers = #tpu.dot_dimension_numbers<[1], [0], [0], [1], [0, 0, 1, 1], [], []>} : vector<8x6xf32>, vector<6x16xf32>, vector<8x16xf32> -> vector<8x16xf32>
    %c0_3 = arith.constant 0 : index
    %c0_4 = arith.constant 0 : index
    %3 = vector.load %arg3[%c0_3, %c0_4] : memref<1x16xf32, #tpu.memory_space<vmem>>, vector<1x16xf32>
    %4 = vector.broadcast %3 : vector<1x16xf32> to vector<8x16xf32>
    %5 = arith.addf %2, %4 : vector<8x16xf32>
    %cst_5 = arith.constant 0.000000e+00 : f32
    %6 = vector.broadcast %cst_5 : f32 to vector<8x16xf32>
    %7 = arith.maximumf %5, %6 : vector<8x16xf32>
    %c0_6 = arith.constant 0 : index
    %c0_7 = arith.constant 0 : index
    %8 = vector.load %arg4[%c0_6, %c0_7] : memref<16x8xf32, #tpu.memory_space<vmem>>, vector<16x8xf32>
    %cst_8 = arith.constant dense<0.000000e+00> : vector<8x8xf32>
    %9 = tpu.matmul %7, %8, %cst_8 {dimension_numbers = #tpu.dot_dimension_numbers<[1], [0], [0], [1], [0, 0, 1, 1], [], []>} : vector<8x16xf32>, vector<16x8xf32>, vector<8x8xf32> -> vector<8x8xf32>
    %c0_9 = arith.constant 0 : index
    %c0_10 = arith.constant 0 : index
    %10 = vector.load %arg5[%c0_9, %c0_10] : memref<1x8xf32, #tpu.memory_space<vmem>>, vector<1x8xf32>
    %11 = vector.broadcast %10 : vector<1x8xf32> to vector<8x8xf32>
    %12 = arith.addf %9, %11 : vector<8x8xf32>
    %cst_11 = arith.constant 0.000000e+00 : f32
    %13 = vector.broadcast %cst_11 : f32 to vector<8x8xf32>
    %14 = arith.maximumf %12, %13 : vector<8x8xf32>
    %c0_12 = arith.constant 0 : index
    %c0_13 = arith.constant 0 : index
    %15 = vector.load %arg6[%c0_12, %c0_13] : memref<8x2xf32, #tpu.memory_space<vmem>>, vector<8x2xf32>
    %cst_14 = arith.constant dense<0.000000e+00> : vector<8x2xf32>
    %16 = tpu.matmul %14, %15, %cst_14 {dimension_numbers = #tpu.dot_dimension_numbers<[1], [0], [0], [1], [0, 0, 1, 1], [], []>} : vector<8x8xf32>, vector<8x2xf32>, vector<8x2xf32> -> vector<8x2xf32>
    %c0_15 = arith.constant 0 : index
    %c0_16 = arith.constant 0 : index
    %17 = vector.load %arg7[%c0_15, %c0_16] : memref<1x2xf32, #tpu.memory_space<vmem>>, vector<1x2xf32>
    %18 = vector.broadcast %17 : vector<1x2xf32> to vector<8x2xf32>
    %19 = arith.addf %16, %18 : vector<8x2xf32>
    %c0_17 = arith.constant 0 : index
    %c0_18 = arith.constant 0 : index
    %20 = vector.load %arg8[%c0_17, %c0_18] : memref<8x2xf32, #tpu.memory_space<vmem>>, vector<8x2xf32>
    tpu.vector_store %arg8[%c0_17, %c0_18], %19 {strides = array<i32>} : memref<8x2xf32, #tpu.memory_space<vmem>>, vector<8x2xf32>,
    return
  }
  func.func @transform_0(%arg0: i32) -> (i32, i32) {
    %c0_i32 = arith.constant 0 : i32
    %c0_i32_0 = arith.constant 0 : i32
    return %arg0, %c0_i32 : i32, i32
  }
  func.func @transform_1(%arg0: i32) -> (i32, i32) {
    %c0_i32 = arith.constant 0 : i32
    %c0_i32_0 = arith.constant 0 : i32
    %c0_i32_1 = arith.constant 0 : i32
    return %c0_i32, %c0_i32_0 : i32, i32
  }
  func.func @transform_2(%arg0: i32) -> (i32, i32) {
    %c0_i32 = arith.constant 0 : i32
    %c0_i32_0 = arith.constant 0 : i32
    %c0_i32_1 = arith.constant 0 : i32
    return %c0_i32, %c0_i32_0 : i32, i32
  }
  func.func @transform_3(%arg0: i32) -> (i32, i32) {
    %c0_i32 = arith.constant 0 : i32
    %c0_i32_0 = arith.constant 0 : i32
    %c0_i32_1 = arith.constant 0 : i32
    return %c0_i32, %c0_i32_0 : i32, i32
  }
  func.func @transform_4(%arg0: i32) -> (i32, i32) {
    %c0_i32 = arith.constant 0 : i32
    %c0_i32_0 = arith.constant 0 : i32
    %c0_i32_1 = arith.constant 0 : i32
    return %c0_i32, %c0_i32_0 : i32, i32
  }
  func.func @transform_5(%arg0: i32) -> (i32, i32) {
    %c0_i32 = arith.constant 0 : i32
    %c0_i32_0 = arith.constant 0 : i32
    %c0_i32_1 = arith.constant 0 : i32
    return %c0_i32, %c0_i32_0 : i32, i32
  }
  func.func @transform_6(%arg0: i32) -> (i32, i32) {
    %c0_i32 = arith.constant 0 : i32
    %c0_i32_0 = arith.constant 0 : i32
    %c0_i32_1 = arith.constant 0 : i32
    return %c0_i32, %c0_i32_0 : i32, i32
  }
  func.func @transform_7(%arg0: i32) -> (i32, i32) {
    %c0_i32 = arith.constant 0 : i32
    %c0_i32_0 = arith.constant 0 : i32
    return %arg0, %c0_i32 : i32, i32
  }
}

</mosaic_0001>

<llo_original>
// kernel: tpu_custom_call.1
$region0: #{tpu_custom_call.1}
  #allocation0 [shape = 'u32[]', space=smem, size = 0x4, offset = 0x4, fixed_abs, tag = 'smem constant byte address 0x4 - core index']
  #allocation1 [shape = 'u32[144,128]{1,0:T(1,128)}', space=vmem, size = 0x12000, scoped, tag = 'internal scratch']
  %s0 = inlined_call_operand.vmem [shape: f32[8,6], index: 0, kind: input, shape index: {}]
  %s1 = inlined_call_operand.vmem [shape: f32[6,16], index: 1, kind: input, shape index: {}]
  %s2 = inlined_call_operand.vmem [shape: f32[1,16], index: 2, kind: input, shape index: {}]
  %s3 = inlined_call_operand.vmem [shape: f32[16,8], index: 3, kind: input, shape index: {}]
  %s4 = inlined_call_operand.vmem [shape: f32[1,8], index: 4, kind: input, shape index: {}]
  %s5 = inlined_call_operand.vmem [shape: f32[8,2], index: 5, kind: input, shape index: {}]
  %s6 = inlined_call_operand.vmem [shape: f32[1,2], index: 6, kind: input, shape index: {}]
  %s7 = inlined_call_operand.vmem [shape: f32[8,2], index: 7, kind: output, shape index: {}]
  %s8 = sld [smem:[#allocation0]]
  $region38: #{tpu_custom_call.1} parent=0
    _
  %s10 = ssub.s32 1, %s8
  %s11 = scalar_select 0, %s10, %s8
  // Predicated region
  $region2: #{tpu_custom_call.1} parent=0 // pred_check
    _
  $region3: #{tpu_custom_call.1} parent=0 // pred_check_branch
    %13 = sbr.rel (0) target = $region5
  $region4: #{tpu_custom_call.1} parent=0 // pred_region
    _
  $region5: #{tpu_custom_call.1} parent=0 // pred_fallthru
    _
  // Predicated region
  $region6: #{tpu_custom_call.1} parent=0 // pred_check
    _
  $region7: #{tpu_custom_call.1} parent=0 // pred_check_branch
    %15 = sbr.rel (0) target = $region9
  $region8: #{tpu_custom_call.1} parent=0 // pred_region
    _
  $region9: #{tpu_custom_call.1} parent=0 // pred_fallthru
    _
  // Predicated region
  $region10: #{tpu_custom_call.1} parent=0 // pred_check
    _
  $region11: #{tpu_custom_call.1} parent=0 // pred_check_branch
    %17 = sbr.rel (0) target = $region13
  $region12: #{tpu_custom_call.1} parent=0 // pred_region
    _
  $region13: #{tpu_custom_call.1} parent=0 // pred_fallthru
    _
  // Predicated region
  $region14: #{tpu_custom_call.1} parent=0 // pred_check
    _
  $region15: #{tpu_custom_call.1} parent=0 // pred_check_branch
    %19 = sbr.rel (0) target = $region17
  $region16: #{tpu_custom_call.1} parent=0 // pred_region
    _
  $region17: #{tpu_custom_call.1} parent=0 // pred_fallthru
    _
  // Predicated region
  $region18: #{tpu_custom_call.1} parent=0 // pred_check
    _
  $region19: #{tpu_custom_call.1} parent=0 // pred_check_branch
    %21 = sbr.rel (0) target = $region21
  $region20: #{tpu_custom_call.1} parent=0 // pred_region
    _
  $region21: #{tpu_custom_call.1} parent=0 // pred_fallthru
    _
  // Predicated region
  $region22: #{tpu_custom_call.1} parent=0 // pred_check
    _
  $region23: #{tpu_custom_call.1} parent=0 // pred_check_branch
    %23 = sbr.rel (0) target = $region25
  $region24: #{tpu_custom_call.1} parent=0 // pred_region
    _
  $region25: #{tpu_custom_call.1} parent=0 // pred_fallthru
    _
  // Predicated region
  $region26: #{tpu_custom_call.1} parent=0 // pred_check
    _
  $region27: #{tpu_custom_call.1} parent=0 // pred_check_branch
    %25 = sbr.rel (0) target = $region29
  $region28: #{tpu_custom_call.1} parent=0 // pred_region
    _
  $region29: #{tpu_custom_call.1} parent=0 // pred_fallthru
    _
  %v26 = vld [vmem:[%s0] sm:$0xff]
  %v27 = vld [vmem:[%s1] sm:$0x3f]
  %v28 = vld [vmem:[%s2] sm:$0x1]
  %v30 = vlaneseq
  %v31 = vshrl.u32 %v30, 7
  %v32 = vsub.s32 0, %v31
  %v33 = vrot.slane %v28, %v32
  %vm35 = vcmask 48128
  %v37 = vsel %vm35, %v26, 0
  %vm39 = vcmask 1045504
  %v41 = vsel %vm39, %v27, 0
  %43 = vmatprep.subr.mxu0 0.0
  %44 = vmatpush1.msra.mxu0 %v41
  %45 = vmatprep.subr.mxu0 0.0
  %46 = vmatpush1.msra.mxu0 0.0
  %47 = vmatprep.subr.mxu0 0.0
  %48 = vmatpush1.msra.mxu0 0.0
  %49 = vmatprep.subr.mxu0 0.0
  %50 = vmatpush1.msra.mxu0 0.0
  %51 = vmatprep.subr.mxu0 0.0
  %52 = vmatpush1.msra.mxu0 0.0
  %53 = vmatprep.subr.mxu0 0.0
  %54 = vmatpush1.msra.mxu0 0.0
  %55 = vmatprep.subr.mxu0 0.0
  %56 = vmatpush1.msra.mxu0 0.0
  %57 = vmatprep.subr.mxu0 0.0
  %58 = vmatpush1.msra.mxu0 0.0
  %59 = vmatprep.subr.mxu0 0.0
  %60 = vmatpush1.msra.mxu0 0.0
  %61 = vmatprep.subr.mxu0 0.0
  %62 = vmatpush1.msra.mxu0 0.0
  %63 = vmatprep.subr.mxu0 0.0
  %64 = vmatpush1.msra.mxu0 0.0
  %65 = vmatprep.subr.mxu0 0.0
  %66 = vmatpush1.msra.mxu0 0.0
  %67 = vmatprep.subr.mxu0 0.0
  %68 = vmatpush1.msra.mxu0 0.0
  %69 = vmatprep.subr.mxu0 0.0
  %70 = vmatpush1.msra.mxu0 0.0
  %71 = vmatprep.subr.mxu0 0.0
  %72 = vmatpush1.msra.mxu0 0.0
  %73 = vmatprep.subr.mxu0 0.0
  %74 = vmatpush1.msra.mxu0 0.0
  %75 = vmatprep.subr.mxu0 0.0
  %76 = vmatpush1.msra.mxu0 0.0
  %77 = vmatprep.subr.mxu0 0.0
  %78 = vmatpush1.msra.mxu0 0.0
  %79 = vmatprep.subr.mxu0 0.0
  %80 = vmatpush1.msra.mxu0 0.0
  %81 = vmatprep.subr.mxu0 0.0
  %82 = vmatpush1.msra.mxu0 0.0
  %83 = vmatprep.subr.mxu0 0.0
  %84 = vmatpush1.msra.mxu0 0.0
  %85 = vmatprep.subr.mxu0 0.0
  %86 = vmatpush1.msra.mxu0 0.0
  %87 = vmatprep.subr.mxu0 0.0
  %88 = vmatpush1.msra.mxu0 0.0
  %89 = vmatprep.subr.mxu0 0.0
  %90 = vmatpush1.msra.mxu0 0.0
  %91 = vmatprep.subr.mxu0 0.0
  %92 = vmatpush1.msra.mxu0 0.0
  %93 = vmatprep.subr.mxu0 0.0
  %94 = vmatpush1.msra.mxu0 0.0
  %95 = vmatprep.subr.mxu0 0.0
  %96 = vmatpush1.msra.mxu0 0.0
  %97 = vmatprep.subr.mxu0 0.0
  %98 = vmatpush1.msra.mxu0 0.0
  %99 = vmatprep.subr.mxu0 0.0
  %100 = vmatpush1.msra.mxu0 0.0
  %101 = vmatprep.subr.mxu0 0.0
  %102 = vmatpush1.msra.mxu0 0.0
  %103 = vmatprep.subr.mxu0 0.0
  %104 = vmatpush1.msra.mxu0 0.0
  %105 = vmatprep.subr.mxu0 0.0
  %106 = vmatpush1.msra.mxu0 0.0
  %107 = vmatprep.mubr.f32.mxu0 0.0
  %108 = vmatmul.mubr.f32.gmra.mrb[0].mxu0 %v37
  %v109 = vpop.f32.mrb[0].mxu0
  %v110 = vadd.f32 %v33, %v109
  %v111 = vpop.f32.mrb[0].mxu0
  %112 = vdwg.mxu0
  %v113 = vmax.f32 %v110, 0.0
  %v114 = vld [vmem:[%s3] sm:$0xff]
  %v115 = vld [vmem:[%s3 + $0x8] sm:$0xff]
  %v116 = vld [vmem:[%s4] sm:$0x1]
  %v118 = vlaneseq
  %v119 = vshrl.u32 %v118, 7
  %v120 = vsub.s32 0, %v119
  %v121 = vrot.slane %v116, %v120
  %vm123 = vcmask 130048
  %v125 = vsel %vm123, %v113, 0
  %127 = vmatprep.subr.mxu0 0.0
  %128 = vmatpush1.msra.mxu0 %v114
  %129 = vmatprep.subr.mxu0 0.0
  %130 = vmatpush1.msra.mxu0 %v115
  %131 = vmatprep.subr.mxu0 0.0
  %132 = vmatpush1.msra.mxu0 0.0
  %133 = vmatprep.subr.mxu0 0.0
  %134 = vmatpush1.msra.mxu0 0.0
  %135 = vmatprep.subr.mxu0 0.0
  %136 = vmatpush1.msra.mxu0 0.0
  %137 = vmatprep.subr.mxu0 0.0
  %138 = vmatpush1.msra.mxu0 0.0
  %139 = vmatprep.subr.mxu0 0.0
  %140 = vmatpush1.msra.mxu0 0.0
  %141 = vmatprep.subr.mxu0 0.0
  %142 = vmatpush1.msra.mxu0 0.0
  %143 = vmatprep.subr.mxu0 0.0
  %144 = vmatpush1.msra.mxu0 0.0
  %145 = vmatprep.subr.mxu0 0.0
  %146 = vmatpush1.msra.mxu0 0.0
  %147 = vmatprep.subr.mxu0 0.0
  %148 = vmatpush1.msra.mxu0 0.0
  %149 = vmatprep.subr.mxu0 0.0
  %150 = vmatpush1.msra.mxu0 0.0
  %151 = vmatprep.subr.mxu0 0.0
  %152 = vmatpush1.msra.mxu0 0.0
  %153 = vmatprep.subr.mxu0 0.0
  %154 = vmatpush1.msra.mxu0 0.0
  %155 = vmatprep.subr.mxu0 0.0
  %156 = vmatpush1.msra.mxu0 0.0
  %157 = vmatprep.subr.mxu0 0.0
  %158 = vmatpush1.msra.mxu0 0.0
  %159 = vmatprep.subr.mxu0 0.0
  %160 = vmatpush1.msra.mxu0 0.0
  %161 = vmatprep.subr.mxu0 0.0
  %162 = vmatpush1.msra.mxu0 0.0
  %163 = vmatprep.subr.mxu0 0.0
  %164 = vmatpush1.msra.mxu0 0.0
  %165 = vmatprep.subr.mxu0 0.0
  %166 = vmatpush1.msra.mxu0 0.0
  %167 = vmatprep.subr.mxu0 0.0
  %168 = vmatpush1.msra.mxu0 0.0
  %169 = vmatprep.subr.mxu0 0.0
  %170 = vmatpush1.msra.mxu0 0.0
  %171 = vmatprep.subr.mxu0 0.0
  %172 = vmatpush1.msra.mxu0 0.0
  %173 = vmatprep.subr.mxu0 0.0
  %174 = vmatpush1.msra.mxu0 0.0
  %175 = vmatprep.subr.mxu0 0.0
  %176 = vmatpush1.msra.mxu0 0.0
  %177 = vmatprep.subr.mxu0 0.0
  %178 = vmatpush1.msra.mxu0 0.0
  %179 = vmatprep.subr.mxu0 0.0
  %180 = vmatpush1.msra.mxu0 0.0
  %181 = vmatprep.subr.mxu0 0.0
  %182 = vmatpush1.msra.mxu0 0.0
  %183 = vmatprep.subr.mxu0 0.0
  %184 = vmatpush1.msra.mxu0 0.0
  %185 = vmatprep.subr.mxu0 0.0
  %186 = vmatpush1.msra.mxu0 0.0
  %187 = vmatprep.subr.mxu0 0.0
  %188 = vmatpush1.msra.mxu0 0.0
  %189 = vmatprep.subr.mxu0 0.0
  %190 = vmatpush1.msra.mxu0 0.0
  %191 = vmatprep.mubr.f32.mxu0 0.0
  %192 = vmatmul.mubr.f32.gmra.mrb[0].mxu0 %v125
  %v193 = vpop.f32.mrb[0].mxu0
  %v194 = vadd.f32 %v121, %v193
  %v195 = vpop.f32.mrb[0].mxu0
  %196 = vdwg.mxu0
  %v197 = vmax.f32 %v194, 0.0
  %v198 = vld [vmem:[%s5] sm:$0xff]
  %v199 = vld [vmem:[%s6] sm:$0x1]
  %v201 = vlaneseq
  %v202 = vshrl.u32 %v201, 7
  %v203 = vsub.s32 0, %v202
  %v204 = vrot.slane %v199, %v203
  %vm206 = vcmask 64512
  %v208 = vsel %vm206, %v197, 0
  %210 = vmatprep.subr.mxu0 0.0
  %211 = vmatpush1.msra.mxu0 %v198
  %212 = vmatprep.subr.mxu0 0.0
  %213 = vmatpush1.msra.mxu0 0.0
  %214 = vmatprep.subr.mxu0 0.0
  %215 = vmatpush1.msra.mxu0 0.0
  %216 = vmatprep.subr.mxu0 0.0
  %217 = vmatpush1.msra.mxu0 0.0
  %218 = vmatprep.subr.mxu0 0.0
  %219 = vmatpush1.msra.mxu0 0.0
  %220 = vmatprep.subr.mxu0 0.0
  %221 = vmatpush1.msra.mxu0 0.0
  %222 = vmatprep.subr.mxu0 0.0
  %223 = vmatpush1.msra.mxu0 0.0
  %224 = vmatprep.subr.mxu0 0.0
  %225 = vmatpush1.msra.mxu0 0.0
  %226 = vmatprep.subr.mxu0 0.0
  %227 = vmatpush1.msra.mxu0 0.0
  %228 = vmatprep.subr.mxu0 0.0
  %229 = vmatpush1.msra.mxu0 0.0
  %230 = vmatprep.subr.mxu0 0.0
  %231 = vmatpush1.msra.mxu0 0.0
  %232 = vmatprep.subr.mxu0 0.0
  %233 = vmatpush1.msra.mxu0 0.0
  %234 = vmatprep.subr.mxu0 0.0
  %235 = vmatpush1.msra.mxu0 0.0
  %236 = vmatprep.subr.mxu0 0.0
  %237 = vmatpush1.msra.mxu0 0.0
  %238 = vmatprep.subr.mxu0 0.0
  %239 = vmatpush1.msra.mxu0 0.0
  %240 = vmatprep.subr.mxu0 0.0
  %241 = vmatpush1.msra.mxu0 0.0
  %242 = vmatprep.subr.mxu0 0.0
  %243 = vmatpush1.msra.mxu0 0.0
  %244 = vmatprep.subr.mxu0 0.0
  %245 = vmatpush1.msra.mxu0 0.0
  %246 = vmatprep.subr.mxu0 0.0
  %247 = vmatpush1.msra.mxu0 0.0
  %248 = vmatprep.subr.mxu0 0.0
  %249 = vmatpush1.msra.mxu0 0.0
  %250 = vmatprep.subr.mxu0 0.0
  %251 = vmatpush1.msra.mxu0 0.0
  %252 = vmatprep.subr.mxu0 0.0
  %253 = vmatpush1.msra.mxu0 0.0
  %254 = vmatprep.subr.mxu0 0.0
  %255 = vmatpush1.msra.mxu0 0.0
  %256 = vmatprep.subr.mxu0 0.0
  %257 = vmatpush1.msra.mxu0 0.0
  %258 = vmatprep.subr.mxu0 0.0
  %259 = vmatpush1.msra.mxu0 0.0
  %260 = vmatprep.subr.mxu0 0.0
  %261 = vmatpush1.msra.mxu0 0.0
  %262 = vmatprep.subr.mxu0 0.0
  %263 = vmatpush1.msra.mxu0 0.0
  %264 = vmatprep.subr.mxu0 0.0
  %265 = vmatpush1.msra.mxu0 0.0
  %266 = vmatprep.subr.mxu0 0.0
  %267 = vmatpush1.msra.mxu0 0.0
  %268 = vmatprep.subr.mxu0 0.0
  %269 = vmatpush1.msra.mxu0 0.0
  %270 = vmatprep.subr.mxu0 0.0
  %271 = vmatpush1.msra.mxu0 0.0
  %272 = vmatprep.subr.mxu0 0.0
  %273 = vmatpush1.msra.mxu0 0.0
  %274 = vmatprep.mubr.f32.mxu0 0.0
  %275 = vmatmul.mubr.f32.gmra.mrb[0].mxu0 %v208
  %v276 = vpop.f32.mrb[0].mxu0
  %v277 = vadd.f32 %v204, %v276
  %v278 = vpop.f32.mrb[0].mxu0
  %279 = vdwg.mxu0
  %vm280 = vcmask 15360
  %281 = vst.msk [vmem:[%s7] sm:$0xff] %vm280, %v277
  // Predicated region
  $region30: #{tpu_custom_call.1} parent=0 // pred_check
    _
  $region31: #{tpu_custom_call.1} parent=0 // pred_check_branch
    %283 = sbr.rel (0) target = $region33
  $region32: #{tpu_custom_call.1} parent=0 // pred_region
    _
  $region33: #{tpu_custom_call.1} parent=0 // pred_fallthru
    _
  // Predicated region
  $region34: #{tpu_custom_call.1} parent=0 // pred_check
    _
  $region35: #{tpu_custom_call.1} parent=0 // pred_check_branch
    %285 = sbr.rel (0) target = $region37
  $region36: #{tpu_custom_call.1} parent=0 // pred_region
    _
  $region37: #{tpu_custom_call.1} parent=0 // pred_fallthru
    _

</llo_original>
